<compile_context>
chip_gen: v6e
topology: v6e:2x2x1
jax: 0.10.0
libtpu: 0.0.40
codegen_flags: <defaults>
</compile_context>

<pallas_src>
import functools

import jax
import jax.numpy as jnp
from jax.experimental import pallas as pl
from jax.experimental.pallas import tpu as pltpu


LANE = 128
MAX_BLOCK_ROWS = 1024   # sweep 512..2048; 1024x128 f32 = 512 KiB per buffer
NUM_CORES = 2           # v7x has 2 TCs/chip; extra parallel axis is a no-op on v5e/v6e


def _round_up(x, m):
    return ((x + m - 1) // m) * m


def _depth_loss_kernel(p_ref, t_ref, acc_ref, *, block_rows, tiles_per_core, n_valid):
    c = pl.program_id(0)   # core-split axis ("parallel")
    j = pl.program_id(1)   # row-tile loop ("arbitrary")

    @pl.when(j == 0)
    def _():
        acc_ref[...] = jnp.zeros_like(acc_ref)

    d = p_ref[...].astype(jnp.float32) - t_ref[...].astype(jnp.float32)
    v = d * d + jnp.abs(d)                       # fused MSE + L1 contribution

    block_elems = block_rows * LANE
    block_start = (c * tiles_per_core + j) * block_elems
    block_end = block_start + block_elems

    def _accum(vals):
        # Fold (block_rows, 128) down onto the (8, 128) accumulator with pure
        # VPU adds; the single cross-lane reduce happens once in the wrapper.
        acc_ref[...] += vals.reshape(-1, 8, LANE).sum(axis=0)

    @pl.when(block_end <= n_valid)
    def _():
        _accum(v)

    @pl.when(block_end > n_valid)
    def _():
        # Tail (or fully out-of-range) block: zero invalid element positions.
        row = jax.lax.broadcasted_iota(jnp.int32, v.shape, 0)
        lane = jax.lax.broadcasted_iota(jnp.int32, v.shape, 1)
        gidx = block_start + row * LANE + lane
        _accum(jnp.where(gidx < n_valid, v, jnp.float32(0.0)))


@jax.jit
def depth_loss(pred, target):
    """(MSE(pred, target) + L1(pred, target)) / 2 with mean reduction."""
    assert pred.shape == target.shape, "pred/target shape mismatch"
    n_elems = int(pred.size)
    assert n_elems > 0

    # Lane-dense 2D view of the flattened tensors. Free reshape when numel is a
    # multiple of 128; otherwise pad minimally to the next lane multiple
    # (padded positions are identical zeros in pred/target and also masked).
    p = pred.reshape(-1)
    t = target.reshape(-1)
    padded = _round_up(n_elems, LANE)
    rows = padded // LANE
    if rows < 8:
        # Tiny-tensor fallback: ensure at least one full (8, 128) tile exists.
        padded = 8 * LANE
        rows = 8
    if padded != n_elems:
        p = jnp.pad(p, (0, padded - n_elems))
        t = jnp.pad(t, (0, padded - n_elems))
    p = p.reshape(rows, LANE)
    t = t.reshape(rows, LANE)

    # Large tile, multiple of 8 sublanes, never taller than the array.
    # (For big tensors this is 1024 rows, which is also bf16-friendly.)
    block_rows = min(MAX_BLOCK_ROWS, (rows // 8) * 8)
    n_row_blocks = pl.cdiv(rows, block_rows)
    tiles_per_core = pl.cdiv(n_row_blocks, NUM_CORES)

    def in_map(c, j):
        # Clamp so out-of-range grid steps re-read a valid block; their
        # contribution is fully masked away inside the kernel.
        return (jnp.minimum(c * tiles_per_core + j, n_row_blocks - 1), 0)

    partials = pl.pallas_call(
        functools.partial(
            _depth_loss_kernel,
            block_rows=block_rows,
            tiles_per_core=tiles_per_core,
            n_valid=n_elems,
        ),
        out_shape=jax.ShapeDtypeStruct((NUM_CORES, 8, LANE), jnp.float32),
        grid_spec=pltpu.PrefetchScalarGridSpec(
            num_scalar_prefetch=0,
            grid=(NUM_CORES, tiles_per_core),
            in_specs=[
                pl.BlockSpec((block_rows, LANE), in_map),
                pl.BlockSpec((block_rows, LANE), in_map),
            ],
            # Per-core (8, 128) partial-sum tile; doubles as the accumulator
            # (same block index across the "arbitrary" axis j).
            out_specs=pl.BlockSpec((None, 8, LANE), lambda c, j: (c, 0, 0)),
        ),
        compiler_params=pltpu.CompilerParams(
            dimension_semantics=("parallel", "arbitrary"),
        ),
    )(p, t)

    # Final cross-lane reduce + normalization in the wrapper (fused by XLA).
    return (jnp.sum(partials) / jnp.float32(n_elems)) * jnp.float32(0.5)


def _ref_loss(pred, target):
    d = pred.astype(jnp.float32) - target.astype(jnp.float32)
    return 0.5 * (jnp.mean(d * d) + jnp.mean(jnp.abs(d)))


if __name__ == "__main__":
    key = jax.random.PRNGKey(0)

    shapes = [
        (2, 1, 32, 32),    # whole (unmasked) block path
        (2, 1, 24, 24),    # partial last block -> in-kernel tail masking
        (3, 1, 13, 13),    # numel not a multiple of 128 -> minimal-pad fallback
        (2, 1, 512, 320),  # multi-tile per core -> accumulation + clamp paths
    ]
    for shape in shapes:
        key, kp, kt = jax.random.split(key, 3)
        pred = jax.random.normal(kp, shape, dtype=jnp.float32)
        target = jax.random.normal(kt, shape, dtype=jnp.float32)

        loss = depth_loss(pred, target)
        jax.block_until_ready(loss)

        ref = _ref_loss(pred, target)
        assert jnp.allclose(loss, ref, rtol=1e-4, atol=1e-6), (shape, loss, ref)

    print("KERNEL_OK")
</pallas_src>

<mosaic_0001>
module attributes {stable_mosaic.version = 11 : i64} {
  func.func @_depth_loss_kernel(%arg0: i32, %arg1: i32, %arg2: memref<16x128xf32, #tpu.memory_space<vmem>>, %arg3: memref<16x128xf32, #tpu.memory_space<vmem>>, %arg4: memref<1x8x128xf32, #tpu.memory_space<vmem>>) attributes {dimension_semantics = [#tpu.dimension_semantics<parallel>, #tpu.dimension_semantics<arbitrary>], iteration_bounds = array<i64: 2, 1>, scalar_prefetch = 0 : i64, scratch_operands = 0 : i64, tpu.core_type = #tpu.core_type<tc>, window_params = [{transform_indices = @transform_0, window_bounds = array<i64: 16, 128>}, {transform_indices = @transform_1, window_bounds = array<i64: 16, 128>}, {transform_indices = @transform_2, window_bounds = array<i64: 1, 8, 128>}]} {
    %c0_i32 = arith.constant 0 : i32
    %0 = arith.cmpi eq, %arg1, %c0_i32 : i32
    %1 = arith.extui %0 : i1 to i32
    %c0_i32_0 = arith.constant 0 : i32
    %2 = arith.cmpi ne, %1, %c0_i32_0 : i32
    scf.if %2 {
      %cst = arith.constant 0.000000e+00 : f32
      %19 = vector.broadcast %cst : f32 to vector<8x128xf32>
      %c0_9 = arith.constant 0 : index
      %c0_10 = arith.constant 0 : index
      %c0_11 = arith.constant 0 : index
      %20 = vector.load %arg4[%c0_9, %c0_10, %c0_11] : memref<1x8x128xf32, #tpu.memory_space<vmem>>, vector<1x8x128xf32>
      %21 = vector.shape_cast %20 : vector<1x8x128xf32> to vector<8x128xf32>
      %22 = vector.shape_cast %19 : vector<8x128xf32> to vector<1x8x128xf32>
      tpu.vector_store %arg4[%c0_9, %c0_10, %c0_11], %22 {strides = array<i32>} : memref<1x8x128xf32, #tpu.memory_space<vmem>>, vector<1x8x128xf32>,
    } else {
    }
    %c0 = arith.constant 0 : index
    %c0_1 = arith.constant 0 : index
    %3 = vector.load %arg2[%c0, %c0_1] : memref<16x128xf32, #tpu.memory_space<vmem>>, vector<16x128xf32>
    %c0_2 = arith.constant 0 : index
    %c0_3 = arith.constant 0 : index
    %4 = vector.load %arg3[%c0_2, %c0_3] : memref<16x128xf32, #tpu.memory_space<vmem>>, vector<16x128xf32>
    %5 = arith.subf %3, %4 : vector<16x128xf32>
    %6 = arith.mulf %5, %5 : vector<16x128xf32>
    %7 = math.absf %5 : vector<16x128xf32>
    %8 = arith.addf %6, %7 : vector<16x128xf32>
    %c1_i32 = arith.constant 1 : i32
    %9 = arith.muli %arg0, %c1_i32 : i32
    %10 = arith.addi %9, %arg1 : i32
    %c2048_i32 = arith.constant 2048 : i32
    %11 = arith.muli %10, %c2048_i32 : i32
    %c2048_i32_4 = arith.constant 2048 : i32
    %12 = arith.addi %11, %c2048_i32_4 : i32
    %c2048_i32_5 = arith.constant 2048 : i32
    %13 = arith.cmpi sle, %12, %c2048_i32_5 : i32
    %14 = arith.extui %13 : i1 to i32
    %c0_i32_6 = arith.constant 0 : i32
    %15 = arith.cmpi ne, %14, %c0_i32_6 : i32
    scf.if %15 {
      %c0_9 = arith.constant 0 : index
      %c0_10 = arith.constant 0 : index
      %c0_11 = arith.constant 0 : index
      %19 = vector.load %arg4[%c0_9, %c0_10, %c0_11] : memref<1x8x128xf32, #tpu.memory_space<vmem>>, vector<1x8x128xf32>
      %20 = vector.shape_cast %19 : vector<1x8x128xf32> to vector<8x128xf32>
      %21 = vector.shape_cast %8 : vector<16x128xf32> to vector<2x8x128xf32>
      %cst = arith.constant dense<0.000000e+00> : vector<8x128xf32>
      %22 = vector.multi_reduction <add>, %21, %cst [0] : vector<2x8x128xf32> to vector<8x128xf32>
      %23 = arith.addf %20, %22 : vector<8x128xf32>
      %c0_12 = arith.constant 0 : index
      %c0_13 = arith.constant 0 : index
      %c0_14 = arith.constant 0 : index
      %24 = vector.load %arg4[%c0_12, %c0_13, %c0_14] : memref<1x8x128xf32, #tpu.memory_space<vmem>>, vector<1x8x128xf32>
      %25 = vector.shape_cast %24 : vector<1x8x128xf32> to vector<8x128xf32>
      %26 = vector.shape_cast %23 : vector<8x128xf32> to vector<1x8x128xf32>
      tpu.vector_store %arg4[%c0_12, %c0_13, %c0_14], %26 {strides = array<i32>} : memref<1x8x128xf32, #tpu.memory_space<vmem>>, vector<1x8x128xf32>,
    } else {
    }
    %c2048_i32_7 = arith.constant 2048 : i32
    %16 = arith.cmpi sgt, %12, %c2048_i32_7 : i32
    %17 = arith.extui %16 : i1 to i32
    %c0_i32_8 = arith.constant 0 : i32
    %18 = arith.cmpi ne, %17, %c0_i32_8 : i32
    scf.if %18 {
      %19 = tpu.iota {dimensions = array<i32: 0>} : vector<16x128xi32>
      %20 = tpu.iota {dimensions = array<i32: 1>} : vector<16x128xi32>
      %c128_i32 = arith.constant 128 : i32
      %21 = vector.broadcast %c128_i32 : i32 to vector<16x128xi32>
      %22 = arith.muli %19, %21 : vector<16x128xi32>
      %23 = vector.broadcast %11 : i32 to vector<16x128xi32>
      %24 = arith.addi %23, %22 : vector<16x128xi32>
      %25 = arith.addi %24, %20 : vector<16x128xi32>
      %c2048_i32_9 = arith.constant 2048 : i32
      %26 = vector.broadcast %c2048_i32_9 : i32 to vector<16x128xi32>
      %27 = arith.cmpi slt, %25, %26 : vector<16x128xi32>
      %cst = arith.constant 0.000000e+00 : f32
      %28 = vector.broadcast %cst : f32 to vector<16x128xf32>
      %29 = arith.select %27, %8, %28 : vector<16x128xi1>, vector<16x128xf32>
      %c0_10 = arith.constant 0 : index
      %c0_11 = arith.constant 0 : index
      %c0_12 = arith.constant 0 : index
      %30 = vector.load %arg4[%c0_10, %c0_11, %c0_12] : memref<1x8x128xf32, #tpu.memory_space<vmem>>, vector<1x8x128xf32>
      %31 = vector.shape_cast %30 : vector<1x8x128xf32> to vector<8x128xf32>
      %32 = vector.shape_cast %29 : vector<16x128xf32> to vector<2x8x128xf32>
      %cst_13 = arith.constant dense<0.000000e+00> : vector<8x128xf32>
      %33 = vector.multi_reduction <add>, %32, %cst_13 [0] : vector<2x8x128xf32> to vector<8x128xf32>
      %34 = arith.addf %31, %33 : vector<8x128xf32>
      %c0_14 = arith.constant 0 : index
      %c0_15 = arith.constant 0 : index
      %c0_16 = arith.constant 0 : index
      %35 = vector.load %arg4[%c0_14, %c0_15, %c0_16] : memref<1x8x128xf32, #tpu.memory_space<vmem>>, vector<1x8x128xf32>
      %36 = vector.shape_cast %35 : vector<1x8x128xf32> to vector<8x128xf32>
      %37 = vector.shape_cast %34 : vector<8x128xf32> to vector<1x8x128xf32>
      tpu.vector_store %arg4[%c0_14, %c0_15, %c0_16], %37 {strides = array<i32>} : memref<1x8x128xf32, #tpu.memory_space<vmem>>, vector<1x8x128xf32>,
    } else {
    }
    return
  }
  func.func @transform_0(%arg0: i32, %arg1: i32) -> (i32, i32) {
    %c1_i32 = arith.constant 1 : i32
    %0 = arith.muli %arg0, %c1_i32 : i32
    %1 = arith.addi %0, %arg1 : i32
    %c0_i32 = arith.constant 0 : i32
    %2 = arith.minsi %1, %c0_i32 : i32
    %c0_i32_0 = arith.constant 0 : i32
    %c0_i32_1 = arith.constant 0 : i32
    return %2, %c0_i32_0 : i32, i32
  }
  func.func @transform_1(%arg0: i32, %arg1: i32) -> (i32, i32) {
    %c1_i32 = arith.constant 1 : i32
    %0 = arith.muli %arg0, %c1_i32 : i32
    %1 = arith.addi %0, %arg1 : i32
    %c0_i32 = arith.constant 0 : i32
    %2 = arith.minsi %1, %c0_i32 : i32
    %c0_i32_0 = arith.constant 0 : i32
    %c0_i32_1 = arith.constant 0 : i32
    return %2, %c0_i32_0 : i32, i32
  }
  func.func @transform_2(%arg0: i32, %arg1: i32) -> (i32, i32, i32) {
    %c0_i32 = arith.constant 0 : i32
    %c0_i32_0 = arith.constant 0 : i32
    %c0_i32_1 = arith.constant 0 : i32
    return %arg0, %c0_i32, %c0_i32_0 : i32, i32, i32
  }
}

</mosaic_0001>

<llo_original>
// kernel: depth_loss.1
$region0: #{depth_loss.1}
  #allocation0 [shape = 'u32[]', space=smem, size = 0x4, offset = 0x4, fixed_abs, tag = 'smem constant byte address 0x4 - core index']
  #allocation1 [shape = 'u32[144,128]{1,0:T(1,128)}', space=vmem, size = 0x12000, scoped, tag = 'internal scratch']
  %s0 = inlined_call_operand.vmem [shape: f32[16,128], index: 0, kind: input, shape index: {}]
  %s1 = inlined_call_operand.vmem [shape: f32[16,128], index: 1, kind: input, shape index: {}]
  %s2 = inlined_call_operand.vmem [shape: f32[2,8,128], index: 2, kind: output, shape index: {}]
  %s3 = sld [smem:[#allocation0]]
  $region53: #{depth_loss.1} parent=0
    _
  %s5 = ssub.s32 1, %s3
  %s6 = scalar_select 0, %s5, %s3
  loop: start=0, step=1, limit=4
  $region2: #{depth_loss.1} parent=0 // loop_pre_header
    _
  $region3: #{depth_loss.1} parent=0 // loop_header
    %s8 = sphi 0, %s12
    %p9 = scmp.ge.s32.totalorder %s8, 4
    %s15 = sphi 0, %s27
    %s16 = sphi 0, %s23
    %s17 = sphi 0, %s15
    %s18 = sphi 0, %s16
    %s19 = sphi 0, %s17
    %s20 = sphi 0, %s18
    %s36 = sphi 0, %s38
    %s39 = sphi 0, %s36
    %s40 = sphi 0, %s39
    %s56 = sphi 0, %s40
    %s68 = sphi 0, %s70
    %s71 = sphi 0, %s68
    %s72 = sphi 0, %s71
    %s88 = sphi 0, %s72
    %s94 = sphi 0, %s96
    %s97 = sphi 0, %s94
    %s98 = sphi 0, %s97
    %s114 = sphi 0, %s98
  $region4: #{depth_loss.1} parent=0 // loop_header_branch
    %11 = sbr.rel (%p9) target = $region8
  $region5: #{depth_loss.1} parent=0 // loop_body
    %s13 = ssub.s32 %s8, 1
    %s14 = ssub.s32 %s8, 2
    %s21 = sadd.s32 1, %s16
    %p22 = scmp.ge.s32.totalorder %s21, 1
    %s23 = scalar_select %p22, 0, %s21
    %s24 = sadd.s32 1, %s15
    %s25 = scalar_select %p22, %s24, %s15
    %p26 = scmp.ge.s32.totalorder %s25, 2
    %s27 = scalar_select %p26, 0, %s25
    %s28 = sadd.s32 %s15, %s16
    %p29 = scmp.lt.s32.totalorder %s28, 0
    %s30 = scalar_select %p29, %s28, 0
    %s31 = sadd.s32 %s27, %s23
    %p32 = scmp.lt.s32.totalorder %s31, 0
    %s33 = scalar_select %p32, %s31, 0
    %s34 = ssub.s32 %s30, %s33
    %p35 = scmp.eq.s32.totalorder %s34, 0
    %s37 = sadd.s32 %s36, 1
    %s38 = scalar_select %p35, %s36, %s37
    %p41 = pneg %p35
    %p42 = scmp.eq.s32.totalorder %s8, 1
    %p43 = por %p41, %p42
    %p44 = scmp.ne.s32.totalorder %s36, %s39
    %p45 = scmp.eq.s32.totalorder %s8, 0
    %p46 = por %p44, %p45
    %p47 = scmp.ne.s32.totalorder %s36, %s39
    %p48 = scmp.eq.s32.totalorder %s13, 1
    %p49 = por %p47, %p48
    %p50 = scmp.ne.s32.totalorder %s39, %s40
    %p51 = scmp.eq.s32.totalorder %s13, 0
    %p52 = por %p50, %p51
    %p53 = scmp.ne.s32.totalorder %s39, %s40
    %p54 = scmp.eq.s32.totalorder %s14, 1
    %p55 = por %p53, %p54
    %p57 = scmp.ne.s32.totalorder %s40, %s56
    %p58 = scmp.eq.s32.totalorder %s14, 0
    %p59 = por %p57, %p58
    %s60 = sadd.s32 %s15, %s16
    %p61 = scmp.lt.s32.totalorder %s60, 0
    %s62 = scalar_select %p61, %s60, 0
    %s63 = sadd.s32 %s27, %s23
    %p64 = scmp.lt.s32.totalorder %s63, 0
    %s65 = scalar_select %p64, %s63, 0
    %s66 = ssub.s32 %s62, %s65
    %p67 = scmp.eq.s32.totalorder %s66, 0
    %s69 = sadd.s32 %s68, 1
    %s70 = scalar_select %p67, %s68, %s69
    %p73 = pneg %p67
    %p74 = scmp.eq.s32.totalorder %s8, 1
    %p75 = por %p73, %p74
    %p76 = scmp.ne.s32.totalorder %s68, %s71
    %p77 = scmp.eq.s32.totalorder %s8, 0
    %p78 = por %p76, %p77
    %p79 = scmp.ne.s32.totalorder %s68, %s71
    %p80 = scmp.eq.s32.totalorder %s13, 1
    %p81 = por %p79, %p80
    %p82 = scmp.ne.s32.totalorder %s71, %s72
    %p83 = scmp.eq.s32.totalorder %s13, 0
    %p84 = por %p82, %p83
    %p85 = scmp.ne.s32.totalorder %s71, %s72
    %p86 = scmp.eq.s32.totalorder %s14, 1
    %p87 = por %p85, %p86
    %p89 = scmp.ne.s32.totalorder %s72, %s88
    %p90 = scmp.eq.s32.totalorder %s14, 0
    %p91 = por %p89, %p90
    %s92 = ssub.s32 %s15, %s27
    %p93 = scmp.eq.s32.totalorder %s92, 0
    %s95 = sadd.s32 %s94, 1
    %s96 = scalar_select %p93, %s94, %s95
    %p99 = pneg %p93
    %p100 = scmp.eq.s32.totalorder %s8, 1
    %p101 = por %p99, %p100
    %p102 = scmp.ne.s32.totalorder %s94, %s97
    %p103 = scmp.eq.s32.totalorder %s8, 0
    %p104 = por %p102, %p103
    %p105 = scmp.ne.s32.totalorder %s94, %s97
    %p106 = scmp.eq.s32.totalorder %s13, 1
    %p107 = por %p105, %p106
    %p108 = scmp.ne.s32.totalorder %s97, %s98
    %p109 = scmp.eq.s32.totalorder %s13, 0
    %p110 = por %p108, %p109
    %p111 = scmp.ne.s32.totalorder %s97, %s98
    %p112 = scmp.eq.s32.totalorder %s14, 1
    %p113 = por %p111, %p112
    %p115 = scmp.ne.s32.totalorder %s98, %s114
    %p116 = scmp.eq.s32.totalorder %s14, 0
    %p117 = por %p115, %p116
    %p118 = scmp.le.s32.totalorder 1, %s8
    %p119 = scmp.lt.s32.totalorder %s8, 3
    %p120 = pnand %p118, %p119
    %p121 = pneg %p120
    // Predicated region
    $region9: #{depth_loss.1} parent=5 // pred_check
      _
    $region10: #{depth_loss.1} parent=5 // pred_check_branch
      %123 = sbr.rel (%p120) target = $region12
    $region11: #{depth_loss.1} parent=5 // pred_region
      %s124 = ssub.s32 %s8, 1
    $region12: #{depth_loss.1} parent=5 // pred_fallthru
      _
    %p125 = scmp.lt.s32.totalorder %s8, 2
    // Predicated region
    $region13: #{depth_loss.1} parent=5 // pred_check
      %p126 = pneg %p125
    $region14: #{depth_loss.1} parent=5 // pred_check_branch
      %128 = sbr.rel (%p126) target = $region16
    $region15: #{depth_loss.1} parent=5 // pred_region
      // Predicated region
      $region17: #{depth_loss.1} parent=15 // pred_check
        %p129 = pneg %p46
      $region18: #{depth_loss.1} parent=15 // pred_check_branch
        %131 = sbr.rel (%p129) target = $region20
      $region19: #{depth_loss.1} parent=15 // pred_region
        %s132 = sadd.s32 %s15, %s16
        %p133 = scmp.lt.s32.totalorder %s132, 0
        %s134 = scalar_select %p133, %s132, 0
        %s135 = smul.u32 2, %s134
        %p136 = scmp.lt.s32.totalorder %s135, 1
        %s137 = scalar_select %p136, %s135, 1
        %s138 = smul.addr %s137, 8
        %s139 = scalar_lea.vmem %s0, %s138
        %s140 = sadd.s32 %s15, %s16
        %p141 = scmp.lt.s32.totalorder %s140, 0
        %s142 = scalar_select %p141, %s140, 0
        %s143 = smul.u32 2, %s142
      $region20: #{depth_loss.1} parent=15 // pred_fallthru
        _
      // Predicated region
      $region21: #{depth_loss.1} parent=15 // pred_check
        %p144 = pneg %p78
      $region22: #{depth_loss.1} parent=15 // pred_check_branch
        %146 = sbr.rel (%p144) target = $region24
      $region23: #{depth_loss.1} parent=15 // pred_region
        %s147 = sadd.s32 %s15, %s16
        %p148 = scmp.lt.s32.totalorder %s147, 0
        %s149 = scalar_select %p148, %s147, 0
        %s150 = smul.u32 2, %s149
        %p151 = scmp.lt.s32.totalorder %s150, 1
        %s152 = scalar_select %p151, %s150, 1
        %s153 = smul.addr %s152, 8
        %s154 = scalar_lea.vmem %s1, %s153
        %s155 = sadd.s32 %s15, %s16
        %p156 = scmp.lt.s32.totalorder %s155, 0
        %s157 = scalar_select %p156, %s155, 0
        %s158 = smul.u32 2, %s157
      $region24: #{depth_loss.1} parent=15 // pred_fallthru
        _
    $region16: #{depth_loss.1} parent=5 // pred_fallthru
      _
    %p159 = scmp.le.s32.totalorder 1, %s8
    %p160 = scmp.lt.s32.totalorder %s8, 3
    %p161 = pnand %p159, %p160
    %p162 = pneg %p161
    // Predicated region
    $region25: #{depth_loss.1} parent=5 // pred_check
      _
    $region26: #{depth_loss.1} parent=5 // pred_check_branch
      %164 = sbr.rel (%p161) target = $region28
    $region27: #{depth_loss.1} parent=5 // pred_region
      %s165 = ssub.s32 %s8, 1
      %s166 = sadd.s32 %s17, %s18
      %p167 = scmp.lt.s32.totalorder %s166, 0
      %s168 = scalar_select %p167, %s166, 0
      %s169 = smul.u32 2, %s168
      %p170 = scmp.lt.s32.totalorder %s169, 1
      %s171 = scalar_select %p170, %s169, 1
      %s172 = smul.addr %s171, 8
      %s173 = scalar_lea.vmem %s0, %s172
      %p174 = pneg %p52
      %p175 = pneg %p49
      %s176 = sadd.s32 %s17, %s18
      %p177 = scmp.lt.s32.totalorder %s176, 0
      %s178 = scalar_select %p177, %s176, 0
      %s179 = smul.u32 2, %s178
      %p180 = scmp.lt.s32.totalorder %s179, 1
      %s181 = scalar_select %p180, %s179, 1
      %s182 = smul.addr %s181, 8
      %s183 = scalar_lea.vmem %s1, %s182
      %p184 = pneg %p84
      %p185 = pneg %p81
      %p186 = pneg %p110
      %p187 = pneg %p107
      %p188 = scmp.lt.s32.totalorder %s17, 1
      %s189 = scalar_select %p188, %s17, 1
      %s190 = smul.addr %s189, 8
      %s191 = scalar_lea.vmem %s2, %s190
      %s192 = sadd.s32 %s17, %s18
      %p193 = scmp.lt.s32.totalorder %s192, 0
      %s194 = scalar_select %p193, %s192, 0
      %s195 = smul.u32 2, %s194
      %p196 = scmp.lt.s32.totalorder %s195, 1
      %s197 = scalar_select %p196, %s195, 1
      %s198 = smul.addr %s197, 8
      %s199 = scalar_lea.vmem %s0, %s198
      %s200 = sadd.s32 %s17, %s18
      %p201 = scmp.lt.s32.totalorder %s200, 0
      %s202 = scalar_select %p201, %s200, 0
      %s203 = smul.u32 2, %s202
      %s204 = sadd.s32 %s17, %s18
      %p205 = scmp.lt.s32.totalorder %s204, 0
      %s206 = scalar_select %p205, %s204, 0
      %s207 = smul.u32 2, %s206
      %p208 = scmp.lt.s32.totalorder %s207, 1
      %s209 = scalar_select %p208, %s207, 1
      %s210 = smul.addr %s209, 8
      %s211 = scalar_lea.vmem %s1, %s210
      %s212 = sadd.s32 %s17, %s18
      %p213 = scmp.lt.s32.totalorder %s212, 0
      %s214 = scalar_select %p213, %s212, 0
      %s215 = smul.u32 2, %s214
      %p216 = scmp.lt.s32.totalorder %s17, 1
      %s217 = scalar_select %p216, %s17, 1
      %s218 = smul.addr %s217, 8
      %s219 = scalar_lea.vmem %s2, %s218
      %p220 = scmp.eq.s32.totalorder %s18, 0
      // Predicated region
      $region29: #{depth_loss.1} parent=27 // pred_check
        %p221 = pneg %p220
      $region30: #{depth_loss.1} parent=27 // pred_check_branch
        %223 = sbr.rel (%p221) target = $region32
      $region31: #{depth_loss.1} parent=27 // pred_region
        %224 = vst [vmem:[%s219] sm:$0xff] 0.0
      $region32: #{depth_loss.1} parent=27 // pred_fallthru
        _
      %v225 = vld [vmem:[%s199] sm:$0xff]
      %v226 = vld [vmem:[%s199 + $0x8] sm:$0xff]
      %v227 = vld [vmem:[%s211] sm:$0xff]
      %v228 = vld [vmem:[%s211 + $0x8] sm:$0xff]
      %v229 = vsub.f32 %v225, %v227
      %v230 = vsub.f32 %v226, %v228
      %v231 = vmul.f32 %v229, %v229
      %v232 = vmul.f32 %v230, %v230
      %v233 = vand.u32 2147483647, %v229
      %v234 = vand.u32 2147483647, %v230
      %v235 = vadd.f32 %v231, %v233
      %v236 = vadd.f32 %v232, %v234
      %s237 = sadd.s32 %s17, %s18
      %s238 = smul.u32 %s237, 2048
      %s239 = sadd.s32 %s238, 2048
      %p240 = scmp.le.s32.totalorder %s239, 2048
      // Predicated region
      $region33: #{depth_loss.1} parent=27 // pred_check
        %p241 = pneg %p240
      $region34: #{depth_loss.1} parent=27 // pred_check_branch
        %243 = sbr.rel (%p241) target = $region36
      $region35: #{depth_loss.1} parent=27 // pred_region
        %v244 = vld [vmem:[%s219] sm:$0xff]
        %v245 = vadd.f32 %v235, %v236
        %v246 = vadd.f32 %v244, %v245
        %247 = vst [vmem:[%s219] sm:$0xff] %v246
      $region36: #{depth_loss.1} parent=27 // pred_fallthru
        _
      %p248 = scmp.gt.s32.totalorder %s239, 2048
      // Predicated region
      $region37: #{depth_loss.1} parent=27 // pred_check
        %p249 = pneg %p248
      $region38: #{depth_loss.1} parent=27 // pred_check_branch
        %251 = sbr.rel (%p249) target = $region40
      $region39: #{depth_loss.1} parent=27 // pred_region
        %v252 = vlaneseq
        %v253 = vshrl.u32 %v252, 7
        %v254 = vadd.s32 %v253, 8
        %v255 = vlaneseq
        %v256 = vand.u32 %v255, 127
        %v257 = vmul.u32 %v253, 128
        %v258 = vmul.u32 %v254, 128
        %v259 = vstv %s238
        %v260 = vadd.s32 %v259, %v257
        %v261 = vadd.s32 %v259, %v258
        %v262 = vadd.s32 %v260, %v256
        %v263 = vadd.s32 %v261, %v256
        %vm264 = vcmp.lt.s32.totalorder %v262, 2048
        %vm265 = vcmp.lt.s32.totalorder %v263, 2048
        %v266 = vsel %vm264, %v235, 0.0
        %v267 = vsel %vm265, %v236, 0.0
        %v268 = vld [vmem:[%s219] sm:$0xff]
        %v269 = vadd.f32 %v266, %v267
        %v270 = vadd.f32 %v268, %v269
        %271 = vst [vmem:[%s219] sm:$0xff] %v270
      $region40: #{depth_loss.1} parent=27 // pred_fallthru
        _
      %p272 = scmp.lt.s32.totalorder %s17, 1
      %s273 = scalar_select %p272, %s17, 1
      %s274 = smul.addr %s273, 8
      %s275 = scalar_lea.vmem %s2, %s274
      // Predicated region
      $region41: #{depth_loss.1} parent=27 // pred_check
        %p276 = pneg %p107
      $region42: #{depth_loss.1} parent=27 // pred_check_branch
        %278 = sbr.rel (%p276) target = $region44
      $region43: #{depth_loss.1} parent=27 // pred_region
        _
      $region44: #{depth_loss.1} parent=27 // pred_fallthru
        _
    $region28: #{depth_loss.1} parent=5 // pred_fallthru
      _
    %p279 = scmp.le.s32.totalorder 2, %s8
    // Predicated region
    $region45: #{depth_loss.1} parent=5 // pred_check
      %p280 = pneg %p279
    $region46: #{depth_loss.1} parent=5 // pred_check_branch
      %282 = sbr.rel (%p280) target = $region48
    $region47: #{depth_loss.1} parent=5 // pred_region
      %s283 = ssub.s32 %s8, 2
      // Predicated region
      $region49: #{depth_loss.1} parent=47 // pred_check
        %p284 = pneg %p113
      $region50: #{depth_loss.1} parent=47 // pred_check_branch
        %286 = sbr.rel (%p284) target = $region52
      $region51: #{depth_loss.1} parent=47 // pred_region
        %p287 = scmp.lt.s32.totalorder %s19, 1
        %s288 = scalar_select %p287, %s19, 1
        %s289 = smul.addr %s288, 8
        %s290 = scalar_lea.vmem %s2, %s289
      $region52: #{depth_loss.1} parent=47 // pred_fallthru
        _
    $region48: #{depth_loss.1} parent=5 // pred_fallthru
      _
  $region6: #{depth_loss.1} parent=0 // loop_footer
    %s12 = sadd.s32 1, %s8
  $region7: #{depth_loss.1} parent=0 // loop_footer_branch
    %7 = sbr.rel target = $region3
  $region8: #{depth_loss.1} parent=0 // loop_exit
    _

</llo_original>
